<compile_context>
chip_gen: v6e
topology: v6e:2x2x1
jax: 0.10.0
libtpu: 0.0.40
codegen_flags: <defaults>
</compile_context>

<pallas_src>
import jax
import jax.numpy as jnp
from jax.experimental import pallas as pl
from jax.experimental.pallas import tpu as pltpu

SUBLANE = 8                      # f32 sublane packing for row-tile alignment
MAX_SINGLE_TILE_ROWS = 4096      # whole-batch-in-VMEM threshold (no grid)
MAX_TILE_N = 2048                # cap on row-tile size for the gridded path
_VMEM_LIMIT = 32 * 1024 * 1024   # explicit scoped-VMEM budget (safe on v5e/v6e/v7x)


def _mlp_kernel(x_ref, w1_ref, b1_ref, w2_ref, b2_ref, o_ref):
    # x:  (tile_n, in_feats)
    # w1: (in_feats, h_feats), b1: (1, h_feats)
    # w2: (h_feats, out_feats), b2: (1, out_feats)
    x = x_ref[...]
    w1 = w1_ref[...]
    w2 = w2_ref[...]

    # fc1 on the MXU: operands stay in their native dtype, accumulate in f32.
    h = jnp.dot(x, w1, preferred_element_type=jnp.float32)
    h = h + b1_ref[...].astype(jnp.float32)           # broadcast (1, H) -> (N, H)
    # TODO(synk): if this kernel ever becomes VALU-visible on v5e (larger
    # feature dims), rewrite as e = exp(-h); pl.reciprocal(1+e, approx=True)
    # to push the divide onto the EUP slot.  Hidden under DMA at these sizes.
    h = jax.nn.sigmoid(h)                              # f32 epilogue (exp -> EUP)

    # fc2: cast the activation to the weight dtype so a bf16 deployment uses
    # the bf16 MXU path (no-op for f32 params).
    y = jnp.dot(h.astype(w2.dtype), w2, preferred_element_type=jnp.float32)
    y = y + b2_ref[...].astype(jnp.float32)

    o_ref[...] = y.astype(o_ref.dtype)


def _choose_tile(n):
    """Row tile <= MAX_TILE_N, sublane-aligned, with an even tile count so the
    'parallel' row axis splits evenly across v7x's two TensorCores."""
    num_tiles = pl.cdiv(n, MAX_TILE_N)
    if num_tiles > 1 and num_tiles % 2 == 1:
        num_tiles += 1
    tile = -(-n // num_tiles)
    return ((tile + SUBLANE - 1) // SUBLANE) * SUBLANE


def mlp_forward(x, w1, b1, w2, b2):
    """x: (N, in_feats); w1: (in_feats, h_feats); b1: (h_feats,);
       w2: (h_feats, out_feats); b2: (out_feats,). Returns (N, out_feats)."""
    n, in_feats = x.shape
    h_feats = w1.shape[1]
    out_feats = w2.shape[1]
    b1_2d = b1.reshape(1, h_feats)
    b2_2d = b2.reshape(1, out_feats)

    if n <= MAX_SINGLE_TILE_ROWS:
        # Small/medium batch: single invocation, all operands VMEM-resident.
        # No grid-step overhead; losing DMA/compute overlap costs ~nothing on
        # a mem-bound kernel this small.
        vmem = pl.BlockSpec(memory_space=pltpu.MemorySpace.VMEM)
        return pl.pallas_call(
            _mlp_kernel,
            out_shape=jax.ShapeDtypeStruct((n, out_feats), x.dtype),
            in_specs=[vmem, vmem, vmem, vmem, vmem],
            out_specs=vmem,
            compiler_params=pltpu.CompilerParams(vmem_limit_bytes=_VMEM_LIMIT),
        )(x, w1, b1_2d, w2, b2_2d)

    # Large batch: 1-D grid over row tiles; weights/biases pinned with
    # index_map -> (0, 0); row axis "parallel" (megacore sharding on v7x,
    # pipelined row-tile DMA on v5e/v6e).  Last ragged block is masked by
    # Pallas on writeback (each output row depends only on its own input row).
    # TODO(synk): when feature dims grow, budget pinned weights as
    # 2*(in*h + h*out)*dtype_bytes against v7x's 64 MiB VMEM and add a
    # K-tiled accumulator grid axis (marked "arbitrary", last).
    tile_n = _choose_tile(n)
    grid = (pl.cdiv(n, tile_n),)
    return pl.pallas_call(
        _mlp_kernel,
        out_shape=jax.ShapeDtypeStruct((n, out_feats), x.dtype),
        grid=grid,
        in_specs=[
            pl.BlockSpec((tile_n, in_feats), lambda i: (i, 0)),
            pl.BlockSpec((in_feats, h_feats), lambda i: (0, 0)),
            pl.BlockSpec((1, h_feats), lambda i: (0, 0)),
            pl.BlockSpec((h_feats, out_feats), lambda i: (0, 0)),
            pl.BlockSpec((1, out_feats), lambda i: (0, 0)),
        ],
        out_specs=pl.BlockSpec((tile_n, out_feats), lambda i: (i, 0)),
        compiler_params=pltpu.CompilerParams(
            dimension_semantics=("parallel",),
            vmem_limit_bytes=_VMEM_LIMIT,
        ),
    )(x, w1, b1_2d, w2, b2_2d)


def init_params(key, in_feats, h_feats, out_feats, dtype=jnp.float32):
    """Deterministic init mimicking nn.Linear default: U(-1/sqrt(fan_in), ...)."""
    k1, k2, k3, k4 = jax.random.split(key, 4)
    bound1 = 1.0 / jnp.sqrt(in_feats)
    bound2 = 1.0 / jnp.sqrt(h_feats)
    # Weights stored as (in, out) = PyTorch weight.T
    w1 = jax.random.uniform(k1, (in_feats, h_feats), dtype, -bound1, bound1)
    b1 = jax.random.uniform(k2, (h_feats,), dtype, -bound1, bound1)
    w2 = jax.random.uniform(k3, (h_feats, out_feats), dtype, -bound2, bound2)
    b2 = jax.random.uniform(k4, (out_feats,), dtype, -bound2, bound2)
    return w1, b1, w2, b2


def reference_forward(x, w1, b1, w2, b2):
    h = x @ w1 + b1
    h = jax.nn.sigmoid(h)
    return h @ w2 + b2


if __name__ == "__main__":
    key = jax.random.PRNGKey(0)
    kx, kp, kx2 = jax.random.split(key, 3)

    IN_FEATS, H_FEATS, OUT_FEATS = 32, 64, 16
    w1, b1, w2, b2 = init_params(kp, IN_FEATS, H_FEATS, OUT_FEATS)

    # --- small batch (no-grid, whole-batch-in-VMEM path) ---
    N_SMALL = 8
    x_small = jax.random.normal(kx, (N_SMALL, IN_FEATS), jnp.float32)
    out_small = jax.block_until_ready(mlp_forward(x_small, w1, b1, w2, b2))
    ref_small = reference_forward(x_small, w1, b1, w2, b2)
    assert out_small.shape == (N_SMALL, OUT_FEATS)
    assert jnp.allclose(out_small, ref_small, atol=1e-5, rtol=1e-5), \
        "small-batch mismatch vs JAX reference"

    # --- large batch (gridded row-tiled path, exercises the ragged last tile) ---
    N_LARGE = 4500   # > MAX_SINGLE_TILE_ROWS -> 4 balanced row tiles, last one ragged
    x_large = jax.random.normal(kx2, (N_LARGE, IN_FEATS), jnp.float32)
    out_large = jax.block_until_ready(mlp_forward(x_large, w1, b1, w2, b2))
    ref_large = reference_forward(x_large, w1, b1, w2, b2)
    assert out_large.shape == (N_LARGE, OUT_FEATS)
    assert jnp.allclose(out_large, ref_large, atol=1e-5, rtol=1e-5), \
        "large-batch mismatch vs JAX reference"

    print("KERNEL_OK")
</pallas_src>

<mosaic_0001>
module attributes {stable_mosaic.version = 11 : i64} {
  func.func @_mlp_kernel(%arg0: memref<8x32xf32, #tpu.memory_space<vmem>>, %arg1: memref<32x64xf32, #tpu.memory_space<vmem>>, %arg2: memref<1x64xf32, #tpu.memory_space<vmem>>, %arg3: memref<64x16xf32, #tpu.memory_space<vmem>>, %arg4: memref<1x16xf32, #tpu.memory_space<vmem>>, %arg5: memref<8x16xf32, #tpu.memory_space<vmem>>) attributes {dimension_semantics = [], scalar_prefetch = 0 : i64, scratch_operands = 0 : i64, tpu.core_type = #tpu.core_type<tc>} {
    %c0 = arith.constant 0 : index
    %c0_0 = arith.constant 0 : index
    %0 = vector.load %arg0[%c0, %c0_0] : memref<8x32xf32, #tpu.memory_space<vmem>>, vector<8x32xf32>
    %c0_1 = arith.constant 0 : index
    %c0_2 = arith.constant 0 : index
    %1 = vector.load %arg1[%c0_1, %c0_2] : memref<32x64xf32, #tpu.memory_space<vmem>>, vector<32x64xf32>
    %c0_3 = arith.constant 0 : index
    %c0_4 = arith.constant 0 : index
    %2 = vector.load %arg3[%c0_3, %c0_4] : memref<64x16xf32, #tpu.memory_space<vmem>>, vector<64x16xf32>
    %cst = arith.constant dense<0.000000e+00> : vector<8x64xf32>
    %3 = tpu.matmul %0, %1, %cst {dimension_numbers = #tpu.dot_dimension_numbers<[1], [0], [0], [1], [0, 0, 1, 1], [], []>} : vector<8x32xf32>, vector<32x64xf32>, vector<8x64xf32> -> vector<8x64xf32>
    %c0_5 = arith.constant 0 : index
    %c0_6 = arith.constant 0 : index
    %4 = vector.load %arg2[%c0_5, %c0_6] : memref<1x64xf32, #tpu.memory_space<vmem>>, vector<1x64xf32>
    %5 = vector.broadcast %4 : vector<1x64xf32> to vector<8x64xf32>
    %6 = arith.addf %3, %5 : vector<8x64xf32>
    %7 = arith.negf %6 : vector<8x64xf32>
    %8 = math.exp %7 : vector<8x64xf32>
    %cst_7 = arith.constant 1.000000e+00 : f32
    %9 = vector.broadcast %cst_7 : f32 to vector<8x64xf32>
    %10 = arith.addf %9, %8 : vector<8x64xf32>
    %11 = arith.divf %9, %10 : vector<8x64xf32>
    %cst_8 = arith.constant dense<0.000000e+00> : vector<8x16xf32>
    %12 = tpu.matmul %11, %2, %cst_8 {dimension_numbers = #tpu.dot_dimension_numbers<[1], [0], [0], [1], [0, 0, 1, 1], [], []>} : vector<8x64xf32>, vector<64x16xf32>, vector<8x16xf32> -> vector<8x16xf32>
    %c0_9 = arith.constant 0 : index
    %c0_10 = arith.constant 0 : index
    %13 = vector.load %arg4[%c0_9, %c0_10] : memref<1x16xf32, #tpu.memory_space<vmem>>, vector<1x16xf32>
    %14 = vector.broadcast %13 : vector<1x16xf32> to vector<8x16xf32>
    %15 = arith.addf %12, %14 : vector<8x16xf32>
    %c0_11 = arith.constant 0 : index
    %c0_12 = arith.constant 0 : index
    %16 = vector.load %arg5[%c0_11, %c0_12] : memref<8x16xf32, #tpu.memory_space<vmem>>, vector<8x16xf32>
    tpu.vector_store %arg5[%c0_11, %c0_12], %15 {strides = array<i32>} : memref<8x16xf32, #tpu.memory_space<vmem>>, vector<8x16xf32>,
    return
  }
}

</mosaic_0001>

<llo_original>
// kernel: tpu_custom_call.1
$region0: #{tpu_custom_call.1}
  #allocation0 [shape = 'u32[]', space=smem, size = 0x4, offset = 0x4, fixed_abs, tag = 'smem constant byte address 0x4 - core index']
  #allocation1 [shape = 'u32[144,128]{1,0:T(1,128)}', space=vmem, size = 0x12000, scoped, tag = 'internal scratch']
  %s0 = inlined_call_operand.vmem [shape: f32[8,32], index: 0, kind: input, shape index: {}]
  %s1 = inlined_call_operand.vmem [shape: f32[32,64], index: 1, kind: input, shape index: {}]
  %s2 = inlined_call_operand.vmem [shape: f32[1,64], index: 2, kind: input, shape index: {}]
  %s3 = inlined_call_operand.vmem [shape: f32[64,16], index: 3, kind: input, shape index: {}]
  %s4 = inlined_call_operand.vmem [shape: f32[1,16], index: 4, kind: input, shape index: {}]
  %s5 = inlined_call_operand.hbm [shape: f32[8,16], index: 5, kind: output, shape index: {}]
  %s6 = sld [smem:[#allocation0]]
  $region30: #{tpu_custom_call.1} parent=0
    _
  %s8 = ssub.s32 1, %s6
  %s9 = scalar_select 0, %s8, %s6
  $region1: #{tpu_custom_call.1} parent=0
    #allocation2 [shape = 'u8[4096]{0}', space=vmem, size = 0x1000, scoped, tag = 'output window, operand 0, single buffered']
    #allocation3 [shape = 's32[1]{0}', space=sflag, size = 0x4, scoped, tag = 'scoped memory for tpu_custom_call.1']
    %10 = vsyncpa [#allocation3], 0
    // Predicated region
    $region2: #{tpu_custom_call.1} parent=1 // pred_check
      _
    $region3: #{tpu_custom_call.1} parent=1 // pred_check_branch
      %12 = sbr.rel (0) target = $region5
    $region4: #{tpu_custom_call.1} parent=1 // pred_region
      _
    $region5: #{tpu_custom_call.1} parent=1 // pred_fallthru
      _
    // Predicated region
    $region6: #{tpu_custom_call.1} parent=1 // pred_check
      _
    $region7: #{tpu_custom_call.1} parent=1 // pred_check_branch
      %14 = sbr.rel (0) target = $region9
    $region8: #{tpu_custom_call.1} parent=1 // pred_region
      _
    $region9: #{tpu_custom_call.1} parent=1 // pred_fallthru
      _
    // Predicated region
    $region10: #{tpu_custom_call.1} parent=1 // pred_check
      _
    $region11: #{tpu_custom_call.1} parent=1 // pred_check_branch
      %16 = sbr.rel (0) target = $region13
    $region12: #{tpu_custom_call.1} parent=1 // pred_region
      _
    $region13: #{tpu_custom_call.1} parent=1 // pred_fallthru
      _
    // Predicated region
    $region14: #{tpu_custom_call.1} parent=1 // pred_check
      _
    $region15: #{tpu_custom_call.1} parent=1 // pred_check_branch
      %18 = sbr.rel (0) target = $region17
    $region16: #{tpu_custom_call.1} parent=1 // pred_region
      _
    $region17: #{tpu_custom_call.1} parent=1 // pred_fallthru
      _
    // Predicated region
    $region18: #{tpu_custom_call.1} parent=1 // pred_check
      _
    $region19: #{tpu_custom_call.1} parent=1 // pred_check_branch
      %20 = sbr.rel (0) target = $region21
    $region20: #{tpu_custom_call.1} parent=1 // pred_region
      _
    $region21: #{tpu_custom_call.1} parent=1 // pred_fallthru
      _
    %v21 = vld [vmem:[%s0] sm:$0xff]
    %v22 = vld [vmem:[%s1] sm:$0xff]
    %v23 = vld [vmem:[%s1 + $0x8] sm:$0xff]
    %v24 = vld [vmem:[%s1 + $0x10] sm:$0xff]
    %v25 = vld [vmem:[%s1 + $0x18] sm:$0xff]
    %v26 = vld [vmem:[%s3] sm:$0xff]
    %v27 = vld [vmem:[%s3 + $0x8] sm:$0xff]
    %v28 = vld [vmem:[%s3 + $0x10] sm:$0xff]
    %v29 = vld [vmem:[%s3 + $0x18] sm:$0xff]
    %v30 = vld [vmem:[%s3 + $0x20] sm:$0xff]
    %v31 = vld [vmem:[%s3 + $0x28] sm:$0xff]
    %v32 = vld [vmem:[%s3 + $0x30] sm:$0xff]
    %v33 = vld [vmem:[%s3 + $0x38] sm:$0xff]
    %v34 = vld [vmem:[%s2] sm:$0x1]
    %v36 = vlaneseq
    %v37 = vshrl.u32 %v36, 7
    %v38 = vsub.s32 0, %v37
    %v39 = vrot.slane %v34, %v38
    %vm41 = vcmask 261120
    %v43 = vsel %vm41, %v21, 0
    %45 = vmatprep.subr.mxu0 0.0
    %46 = vmatpush1.msra.mxu0 0.0
    %47 = vmatprep.subr.mxu0 0.0
    %48 = vmatpush1.msra.mxu0 0.0
    %49 = vmatprep.subr.mxu0 0.0
    %50 = vmatpush1.msra.mxu0 0.0
    %51 = vmatprep.subr.mxu0 0.0
    %52 = vmatpush1.msra.mxu0 0.0
    %53 = vmatprep.subr.mxu0 0.0
    %54 = vmatpush1.msra.mxu0 0.0
    %55 = vmatprep.subr.mxu0 0.0
    %56 = vmatpush1.msra.mxu0 0.0
    %57 = vmatprep.subr.mxu0 0.0
    %58 = vmatpush1.msra.mxu0 0.0
    %59 = vmatprep.subr.mxu0 0.0
    %60 = vmatpush1.msra.mxu0 0.0
    %61 = vmatprep.subr.mxu0 0.0
    %62 = vmatpush1.msra.mxu0 0.0
    %63 = vmatprep.subr.mxu0 0.0
    %64 = vmatpush1.msra.mxu0 0.0
    %65 = vmatprep.subr.mxu0 0.0
    %66 = vmatpush1.msra.mxu0 0.0
    %67 = vmatprep.subr.mxu0 0.0
    %68 = vmatpush1.msra.mxu0 0.0
    %69 = vmatprep.subr.mxu0 0.0
    %70 = vmatpush1.msra.mxu0 %v25
    %71 = vmatprep.subr.mxu0 0.0
    %72 = vmatpush1.msra.mxu0 %v24
    %73 = vmatprep.subr.mxu0 0.0
    %74 = vmatpush1.msra.mxu0 %v23
    %75 = vmatprep.subr.mxu0 0.0
    %76 = vmatpush1.msra.mxu0 %v22
    %77 = vmatprep.subr.mxu0 0.0
    %78 = vmatpush2.msra.mxu0 0.0
    %79 = vmatprep.subr.mxu0 0.0
    %80 = vmatpush2.msra.mxu0 0.0
    %81 = vmatprep.subr.mxu0 0.0
    %82 = vmatpush2.msra.mxu0 0.0
    %83 = vmatprep.subr.mxu0 0.0
    %84 = vmatpush2.msra.mxu0 0.0
    %85 = vmatprep.subr.mxu0 0.0
    %86 = vmatpush2.msra.mxu0 0.0
    %87 = vmatprep.subr.mxu0 0.0
    %88 = vmatpush2.msra.mxu0 0.0
    %89 = vmatprep.subr.mxu0 0.0
    %90 = vmatpush2.msra.mxu0 0.0
    %91 = vmatprep.subr.mxu0 0.0
    %92 = vmatpush2.msra.mxu0 0.0
    %93 = vmatprep.subr.mxu0 0.0
    %94 = vmatpush2.msra.mxu0 0.0
    %95 = vmatprep.subr.mxu0 0.0
    %96 = vmatpush2.msra.mxu0 0.0
    %97 = vmatprep.subr.mxu0 0.0
    %98 = vmatpush2.msra.mxu0 0.0
    %99 = vmatprep.subr.mxu0 0.0
    %100 = vmatpush2.msra.mxu0 0.0
    %101 = vmatprep.subr.mxu0 0.0
    %102 = vmatpush2.msra.mxu0 0.0
    %103 = vmatprep.subr.mxu0 0.0
    %104 = vmatpush2.msra.mxu0 0.0
    %105 = vmatprep.subr.mxu0 0.0
    %106 = vmatpush2.msra.mxu0 0.0
    %107 = vmatprep.subr.mxu0 0.0
    %108 = vmatpush2.msra.mxu0 0.0
    %109 = vmatprep.mubr.f32.mxu0 0.0
    %110 = vmatmul.mubr.f32.gmra.mxu0 %v43
    %v111 = vpop.f32.mrf.mxu0
    %v112 = vadd.f32 %v39, %v111
    %v113 = vpop.f32.mrf.mxu0
    %114 = vdwg.mxu0
    %v115 = vxor.u32 %v112, 2147483648
    %v116 = vmul.f32 %v115, 1.442695
    %v117 = vpow.pop %v116
    %v118 = vadd.f32 %v117, 1.0
    %v119 = vrcp.pop %v118
    %v120 = vmul.f32 1.0, %v119
    %v121 = vld [vmem:[%s4] sm:$0x1]
    %v123 = vlaneseq
    %v124 = vshrl.u32 %v123, 7
    %v125 = vsub.s32 0, %v124
    %v126 = vrot.slane %v121, %v125
    %vm128 = vcmask 523264
    %v130 = vsel %vm128, %v120, 0
    %132 = vmatprep.subr.mxu0 0.0
    %133 = vmatpush1.msra.mxu0 0.0
    %134 = vmatprep.subr.mxu0 0.0
    %135 = vmatpush1.msra.mxu0 0.0
    %136 = vmatprep.subr.mxu0 0.0
    %137 = vmatpush1.msra.mxu0 0.0
    %138 = vmatprep.subr.mxu0 0.0
    %139 = vmatpush1.msra.mxu0 0.0
    %140 = vmatprep.subr.mxu0 0.0
    %141 = vmatpush1.msra.mxu0 0.0
    %142 = vmatprep.subr.mxu0 0.0
    %143 = vmatpush1.msra.mxu0 0.0
    %144 = vmatprep.subr.mxu0 0.0
    %145 = vmatpush1.msra.mxu0 0.0
    %146 = vmatprep.subr.mxu0 0.0
    %147 = vmatpush1.msra.mxu0 0.0
    %148 = vmatprep.subr.mxu0 0.0
    %149 = vmatpush1.msra.mxu0 %v33
    %150 = vmatprep.subr.mxu0 0.0
    %151 = vmatpush1.msra.mxu0 %v32
    %152 = vmatprep.subr.mxu0 0.0
    %153 = vmatpush1.msra.mxu0 %v31
    %154 = vmatprep.subr.mxu0 0.0
    %155 = vmatpush1.msra.mxu0 %v30
    %156 = vmatprep.subr.mxu0 0.0
    %157 = vmatpush1.msra.mxu0 %v29
    %158 = vmatprep.subr.mxu0 0.0
    %159 = vmatpush1.msra.mxu0 %v28
    %160 = vmatprep.subr.mxu0 0.0
    %161 = vmatpush1.msra.mxu0 %v27
    %162 = vmatprep.subr.mxu0 0.0
    %163 = vmatpush1.msra.mxu0 %v26
    %164 = vmatprep.subr.mxu0 0.0
    %165 = vmatpush2.msra.mxu0 0.0
    %166 = vmatprep.subr.mxu0 0.0
    %167 = vmatpush2.msra.mxu0 0.0
    %168 = vmatprep.subr.mxu0 0.0
    %169 = vmatpush2.msra.mxu0 0.0
    %170 = vmatprep.subr.mxu0 0.0
    %171 = vmatpush2.msra.mxu0 0.0
    %172 = vmatprep.subr.mxu0 0.0
    %173 = vmatpush2.msra.mxu0 0.0
    %174 = vmatprep.subr.mxu0 0.0
    %175 = vmatpush2.msra.mxu0 0.0
    %176 = vmatprep.subr.mxu0 0.0
    %177 = vmatpush2.msra.mxu0 0.0
    %178 = vmatprep.subr.mxu0 0.0
    %179 = vmatpush2.msra.mxu0 0.0
    %180 = vmatprep.subr.mxu0 0.0
    %181 = vmatpush2.msra.mxu0 0.0
    %182 = vmatprep.subr.mxu0 0.0
    %183 = vmatpush2.msra.mxu0 0.0
    %184 = vmatprep.subr.mxu0 0.0
    %185 = vmatpush2.msra.mxu0 0.0
    %186 = vmatprep.subr.mxu0 0.0
    %187 = vmatpush2.msra.mxu0 0.0
    %188 = vmatprep.subr.mxu0 0.0
    %189 = vmatpush2.msra.mxu0 0.0
    %190 = vmatprep.subr.mxu0 0.0
    %191 = vmatpush2.msra.mxu0 0.0
    %192 = vmatprep.subr.mxu0 0.0
    %193 = vmatpush2.msra.mxu0 0.0
    %194 = vmatprep.subr.mxu0 0.0
    %195 = vmatpush2.msra.mxu0 0.0
    %196 = vmatprep.mubr.f32.mxu0 0.0
    %197 = vmatmul.mubr.f32.gmra.mxu0 %v130
    %v198 = vpop.f32.mrf.mxu0
    %v199 = vadd.f32 %v126, %v198
    %v200 = vpop.f32.mrf.mxu0
    %201 = vdwg.mxu0
    %vm202 = vcmask 130048
    %203 = vst.msk [vmem:[#allocation2] sm:$0xff] %vm202, %v199
    // Predicated region
    $region22: #{tpu_custom_call.1} parent=1 // pred_check
      _
    $region23: #{tpu_custom_call.1} parent=1 // pred_check_branch
      %205 = sbr.rel (0) target = $region25
    $region24: #{tpu_custom_call.1} parent=1 // pred_region
      %s207 = ssub.s32 128, 128
      %208 = vsyncadd [#allocation3], %s207
      %s210 = sshll.u32 [#allocation2], 4
      %s211 = int_to_ptr.vmem [resolvable:$true] %s210
      %213 = dma.vmem_to_hbm [thread:$0]  %s211, 128, %s5, [#allocation3]
    $region25: #{tpu_custom_call.1} parent=1 // pred_fallthru
      _
    // Predicated region
    $region26: #{tpu_custom_call.1} parent=1 // pred_check
      _
    $region27: #{tpu_custom_call.1} parent=1 // pred_check_branch
      %215 = sbr.rel (0) target = $region29
    $region28: #{tpu_custom_call.1} parent=1 // pred_region
      %216 = dma.done [#allocation3], 128
    $region29: #{tpu_custom_call.1} parent=1 // pred_fallthru
      _
    %217 = vsyncpa [#allocation3], 1

</llo_original>
